<compile_context>
chip_gen: v7x
topology: tpu7x:2x2x1
jax: 0.10.0
libtpu: 0.0.40
codegen_flags: <defaults>
</compile_context>

<pallas_src>
import functools
import math

import jax
import jax.numpy as jnp
from jax import lax
from jax.experimental import pallas as pl
from jax.experimental.pallas import tpu as pltpu


def _vmem_limit_bytes():
    """Generation-aware scoped-VMEM budget (v5e/v6e: 128 MiB phys, v7x: 64 MiB)."""
    try:
        cap = pltpu.get_tpu_info().vmem_capacity_bytes
    except Exception:
        cap = 128 * 1024 * 1024
    if cap >= 128 * 1024 * 1024:
        return 64 * 1024 * 1024          # v5e / v6e
    return min(48 * 1024 * 1024, (cap * 3) // 4)   # v7x


_VMEM_LIMIT = _vmem_limit_bytes()
_SCORE_BYTES_CAP = 8 * 1024 * 1024       # bound on the (H, tq, tk) f32 score temp


def _pick_tile(dim, target):
    """Largest divisor of `dim` <= target, preferring multiples of 128, then 8."""
    if dim <= target:
        return dim
    for align in (128, 8):
        t = (target // align) * align
        while t >= align:
            if dim % t == 0:
                return t
            t -= align
    # TODO(synk): pad awkward (prime-ish) lengths; full-dim fallback may blow VMEM.
    return dim


# ----------------------------------------------------------------------------
# Fused Q/K/V projection (self-attention): x read from HBM once, head-major
# bf16 outputs (B, H, L, E).  Matmuls accumulate in f32; only the stored
# intermediates are bf16 (halves the HBM round trip to the attention kernel).
# ----------------------------------------------------------------------------
def _qkv_headmajor_kernel(x_ref, wq_ref, wk_ref, wv_ref, bq_ref, bk_ref, bv_ref,
                          q_ref, k_ref, v_ref, *, n_heads, e_dim, dv_dim):
    x = x_ref[...]                                            # (tm, d_model) f32
    q = jnp.dot(x, wq_ref[...], preferred_element_type=jnp.float32) + bq_ref[...]
    k = jnp.dot(x, wk_ref[...], preferred_element_type=jnp.float32) + bk_ref[...]
    v = jnp.dot(x, wv_ref[...], preferred_element_type=jnp.float32) + bv_ref[...]
    # Head split happens here, once per projected tile (not in the attention loop).
    for h in range(n_heads):
        q_ref[h] = q[:, h * e_dim:(h + 1) * e_dim].astype(q_ref.dtype)
        k_ref[h] = k[:, h * e_dim:(h + 1) * e_dim].astype(k_ref.dtype)
        v_ref[h] = v[:, h * dv_dim:(h + 1) * dv_dim].astype(v_ref.dtype)


def pallas_qkv_projection(x, wq, bq, wk, bk, wv, bv, *, n_heads, row_tile=512,
                          out_dtype=jnp.bfloat16):
    B, L, d_in = x.shape
    dq, dk, dv = wq.shape[1], wk.shape[1], wv.shape[1]
    assert dq == dk and dq % n_heads == 0 and dv % n_heads == 0
    H = n_heads
    E, Dv = dq // H, dv // H
    tm = _pick_tile(L, row_tile)
    kernel = functools.partial(_qkv_headmajor_kernel, n_heads=H, e_dim=E, dv_dim=Dv)
    cost = pl.CostEstimate(
        flops=2 * B * L * d_in * (dq + dk + dv),
        transcendentals=0,
        bytes_accessed=4 * B * L * d_in + 4 * d_in * (dq + dk + dv)
                       + 2 * B * L * (dq + dk + dv),
    )
    return pl.pallas_call(
        kernel,
        out_shape=(
            jax.ShapeDtypeStruct((B, H, L, E), out_dtype),
            jax.ShapeDtypeStruct((B, H, L, E), out_dtype),
            jax.ShapeDtypeStruct((B, H, L, Dv), out_dtype),
        ),
        grid=(B, L // tm),
        in_specs=[
            pl.BlockSpec((None, tm, d_in), lambda b, i: (b, i, 0)),
            pl.BlockSpec((d_in, dq), lambda b, i: (0, 0)),   # weights resident
            pl.BlockSpec((d_in, dk), lambda b, i: (0, 0)),
            pl.BlockSpec((d_in, dv), lambda b, i: (0, 0)),
            pl.BlockSpec((1, dq), lambda b, i: (0, 0)),
            pl.BlockSpec((1, dk), lambda b, i: (0, 0)),
            pl.BlockSpec((1, dv), lambda b, i: (0, 0)),
        ],
        out_specs=(
            pl.BlockSpec((None, H, tm, E), lambda b, i: (b, 0, i, 0)),
            pl.BlockSpec((None, H, tm, E), lambda b, i: (b, 0, i, 0)),
            pl.BlockSpec((None, H, tm, Dv), lambda b, i: (b, 0, i, 0)),
        ),
        compiler_params=pltpu.CompilerParams(
            dimension_semantics=("parallel", "parallel"),
            vmem_limit_bytes=_VMEM_LIMIT,
        ),
        cost_estimate=cost,
    )(x, wq, wk, wv, bq.reshape(1, dq), bk.reshape(1, dk), bv.reshape(1, dv))


# ----------------------------------------------------------------------------
# Single head-major projection (cross-attention path: distinct q/k/v tensors).
# ----------------------------------------------------------------------------
def _proj_headmajor_kernel(x_ref, w_ref, b_ref, o_ref, *, n_heads, head_dim):
    y = jnp.dot(x_ref[...], w_ref[...], preferred_element_type=jnp.float32) + b_ref[...]
    for h in range(n_heads):
        o_ref[h] = y[:, h * head_dim:(h + 1) * head_dim].astype(o_ref.dtype)


def pallas_head_projection(x, w, b, *, n_heads, row_tile=512, out_dtype=jnp.bfloat16):
    B, L, d_in = x.shape
    d_out = w.shape[1]
    assert d_out % n_heads == 0
    H = n_heads
    hd = d_out // H
    tm = _pick_tile(L, row_tile)
    kernel = functools.partial(_proj_headmajor_kernel, n_heads=H, head_dim=hd)
    return pl.pallas_call(
        kernel,
        out_shape=jax.ShapeDtypeStruct((B, H, L, hd), out_dtype),
        grid=(B, L // tm),
        in_specs=[
            pl.BlockSpec((None, tm, d_in), lambda b, i: (b, i, 0)),
            pl.BlockSpec((d_in, d_out), lambda b, i: (0, 0)),
            pl.BlockSpec((1, d_out), lambda b, i: (0, 0)),
        ],
        out_specs=pl.BlockSpec((None, H, tm, hd), lambda b, i: (b, 0, i, 0)),
        compiler_params=pltpu.CompilerParams(
            dimension_semantics=("parallel", "parallel"),
            vmem_limit_bytes=_VMEM_LIMIT,
        ),
    )(x, w, b.reshape(1, d_out))


# ----------------------------------------------------------------------------
# Flash-style multi-head attention (head-major bf16 inputs) + fused out proj.
#   q : (B, H, L_Q, E)   k : (B, H, L_K, E)   v : (B, H, L_K, Dv)   (bf16)
#   out = softmax(q k^T) v  -> heads merged through wo  -> (B, L_Q, d_model)
# (the 1/sqrt(E) scale is already folded into the q projection weights)
# ----------------------------------------------------------------------------
def _attn_outproj_kernel(q_ref, k_ref, v_ref, wo_ref, bo_ref, o_ref,
                         m_sc, l_sc, acc_sc):
    ki = pl.program_id(2)

    @pl.when(ki == 0)
    def _init():
        m_sc[...] = jnp.full(m_sc.shape, -jnp.inf, m_sc.dtype)
        l_sc[...] = jnp.zeros_like(l_sc)
        acc_sc[...] = jnp.zeros_like(acc_sc)

    q = q_ref[...]                      # (H, tq, E)  bf16, pre-scaled
    k = k_ref[...]                      # (H, tk, E)  bf16
    v = v_ref[...]                      # (H, tk, Dv) bf16

    # Batched-over-heads score matmul contracting E (no k-transpose copy).
    s = lax.dot_general(q, k, (((2,), (2,)), ((0,), (0,))),
                        preferred_element_type=jnp.float32)        # (H, tq, tk) f32

    m_prev = m_sc[...]                                              # (H, tq, 1)
    m_new = jnp.maximum(m_prev, jnp.max(s, axis=-1, keepdims=True))
    alpha = jnp.exp(m_prev - m_new)                                 # f32 softmax math
    p = jnp.exp(s - m_new)
    l_sc[...] = alpha * l_sc[...] + jnp.sum(p, axis=-1, keepdims=True)
    pv = lax.dot_general(p.astype(v.dtype), v, (((2,), (1,)), ((0,), (0,))),
                         preferred_element_type=jnp.float32)        # (H, tq, Dv)
    acc_sc[...] = alpha * acc_sc[...] + pv
    m_sc[...] = m_new

    @pl.when(ki == pl.num_programs(2) - 1)
    def _finalize():
        # Exact reciprocal: runs once per (b, qi) tile, cost negligible.
        inv_l = pl.reciprocal(l_sc[...], approx=False)              # (H, tq, 1)
        normed = acc_sc[...] * inv_l                                # (H, tq, Dv) f32
        # Fused output projection: per-head sublane-row slices of wo (batched dot),
        # then a head-sum -- no lane concatenate.
        per_head = lax.dot_general(normed, wo_ref[...],
                                   (((2,), (1,)), ((0,), (0,))),
                                   preferred_element_type=jnp.float32)  # (H, tq, dm)
        o_ref[...] = (jnp.sum(per_head, axis=0) + bo_ref[...]).astype(o_ref.dtype)


def pallas_attention_with_out_proj(q, k, v, wo, bo, *, q_tile=256, k_tile=512):
    B, H, L_Q, E = q.shape
    _, _, L_K, _ = k.shape
    _, _, L_V, Dv = v.shape
    assert L_K == L_V, "keys/values sequence lengths must match"
    d_model = wo.shape[-1]
    wo_h = wo.reshape(H, Dv, d_model)   # free reshape (row-major contiguous)

    tq = _pick_tile(L_Q, q_tile)
    # v7x has 2 TensorCores sharded over the parallel grid axes: keep >= 2 units.
    if B * (L_Q // tq) < 2 and tq % 16 == 0:
        tq //= 2
    tk = _pick_tile(L_K, k_tile)
    # Bound the (H, tq, tk) f32 score/prob temporaries.
    while H * tq * tk * 4 > _SCORE_BYTES_CAP and tk % 256 == 0:
        tk //= 2

    grid = (B, L_Q // tq, L_K // tk)
    cost = pl.CostEstimate(
        flops=2 * B * H * L_Q * L_K * (E + Dv) + 2 * B * L_Q * H * Dv * d_model,
        transcendentals=B * H * L_Q * L_K,
        bytes_accessed=2 * B * H * (L_Q * E + (L_Q // tq) * L_K * (E + Dv))
                       + 4 * (H * Dv * d_model + d_model + B * L_Q * d_model),
    )

    return pl.pallas_call(
        _attn_outproj_kernel,
        out_shape=jax.ShapeDtypeStruct((B, L_Q, d_model), jnp.float32),
        grid=grid,
        in_specs=[
            pl.BlockSpec((None, H, tq, E), lambda b, qi, ki: (b, 0, qi, 0)),
            pl.BlockSpec((None, H, tk, E), lambda b, qi, ki: (b, 0, ki, 0)),
            pl.BlockSpec((None, H, tk, Dv), lambda b, qi, ki: (b, 0, ki, 0)),
            pl.BlockSpec((H, Dv, d_model), lambda b, qi, ki: (0, 0, 0)),  # wo resident
            pl.BlockSpec((1, d_model), lambda b, qi, ki: (0, 0)),         # bo resident
        ],
        out_specs=pl.BlockSpec((None, tq, d_model), lambda b, qi, ki: (b, qi, 0)),
        scratch_shapes=[
            pltpu.VMEM((H, tq, 1), jnp.float32),    # running max
            pltpu.VMEM((H, tq, 1), jnp.float32),    # running denominator
            pltpu.VMEM((H, tq, Dv), jnp.float32),   # output accumulator
        ],
        compiler_params=pltpu.CompilerParams(
            dimension_semantics=("parallel", "parallel", "arbitrary"),
            vmem_limit_bytes=_VMEM_LIMIT,
        ),
        cost_estimate=cost,
    )(q, k, v, wo_h, bo.reshape(1, d_model))


# ----------------------------------------------------------------------------
# AttentionLayer parameters + forward (mirrors the PyTorch module)
# ----------------------------------------------------------------------------
def init_attention_layer_params(key, d_model, n_heads, d_keys=None, d_values=None):
    d_keys = d_keys or d_model // n_heads
    d_values = d_values or d_model // n_heads
    keys = jax.random.split(key, 8)

    def lin_init(kw, kb, d_in, d_out):
        bound = 1.0 / math.sqrt(d_in)
        # stored transposed relative to PyTorch: (d_in, d_out)
        w = jax.random.uniform(kw, (d_in, d_out), jnp.float32, -bound, bound)
        b = jax.random.uniform(kb, (d_out,), jnp.float32, -bound, bound)
        return w, b

    wq, bq = lin_init(keys[0], keys[1], d_model, d_keys * n_heads)
    wk, bk = lin_init(keys[2], keys[3], d_model, d_keys * n_heads)
    wv, bv = lin_init(keys[4], keys[5], d_model, d_values * n_heads)
    wo, bo = lin_init(keys[6], keys[7], d_values * n_heads, d_model)
    return dict(wq=wq, bq=bq, wk=wk, bk=bk, wv=wv, bv=bv, wo=wo, bo=bo,
                n_heads=n_heads)


def attention_layer_forward(params, queries, keys, values, attn_mask=None):
    # TODO(synk): only the attn_mask=None (FullAttention, eval mode) path exists.
    assert attn_mask is None
    H = params["n_heads"]
    dq = params["wq"].shape[1]
    dk = params["wk"].shape[1]
    dv = params["wv"].shape[1]
    assert dq == dk and dq % H == 0 and dv % H == 0
    E = dq // H
    scale = 1.0 / math.sqrt(E)          # FullAttention default scale
    # Fold the softmax scale into the query projection (free: weights only).
    wq = params["wq"] * scale
    bq = params["bq"] * scale

    if (queries is keys) and (keys is values):
        # self-attention: fused projection, activation read from HBM once
        qh, kh, vh = pallas_qkv_projection(
            queries, wq, bq, params["wk"], params["bk"], params["wv"], params["bv"],
            n_heads=H)
    else:
        qh = pallas_head_projection(queries, wq, bq, n_heads=H)
        kh = pallas_head_projection(keys, params["wk"], params["bk"], n_heads=H)
        vh = pallas_head_projection(values, params["wv"], params["bv"], n_heads=H)

    return pallas_attention_with_out_proj(qh, kh, vh, params["wo"], params["bo"])


# ----------------------------------------------------------------------------
# Pure-JAX reference for correctness checks
# ----------------------------------------------------------------------------
def _reference_forward(params, queries, keys, values):
    B, L_Q, _ = queries.shape
    H = params["n_heads"]
    q = queries @ params["wq"] + params["bq"]
    k = keys @ params["wk"] + params["bk"]
    v = values @ params["wv"] + params["bv"]
    E = q.shape[-1] // H
    Dv = v.shape[-1] // H
    q = q.reshape(B, L_Q, H, E).transpose(0, 2, 1, 3)
    k = k.reshape(B, keys.shape[1], H, E).transpose(0, 2, 1, 3)
    v = v.reshape(B, values.shape[1], H, Dv).transpose(0, 2, 1, 3)
    s = jnp.einsum("bhqe,bhke->bhqk", q, k) / math.sqrt(E)
    p = jax.nn.softmax(s, axis=-1)
    o = jnp.einsum("bhqk,bhkd->bhqd", p, v)
    o = o.transpose(0, 2, 1, 3).reshape(B, L_Q, H * Dv)
    return o @ params["wo"] + params["bo"]


# ----------------------------------------------------------------------------
if __name__ == "__main__":
    def check(B, L, d_model, n_heads, self_attn, seed):
        root = jax.random.PRNGKey(seed)
        kp, kq, kk, kv = jax.random.split(root, 4)
        params = init_attention_layer_params(kp, d_model, n_heads)
        if self_attn:
            x = jax.random.normal(kq, (B, L, d_model), jnp.float32)
            out = attention_layer_forward(params, x, x, x, attn_mask=None)
            ref = _reference_forward(params, x, x, x)
        else:
            q = jax.random.normal(kq, (B, L, d_model), jnp.float32)
            k = jax.random.normal(kk, (B, L, d_model), jnp.float32)
            v = jax.random.normal(kv, (B, L, d_model), jnp.float32)
            out = attention_layer_forward(params, q, k, v, attn_mask=None)
            ref = _reference_forward(params, q, k, v)
        out = jax.block_until_ready(out)
        assert out.shape == (B, L, d_model)
        # bf16 q/k/v intermediates feed the MXU -> compare against the f32
        # reference with a bf16-appropriate tolerance.
        assert jnp.allclose(out, ref, atol=5e-2, rtol=5e-2), (
            f"mismatch vs reference (B={B}, L={L}, d_model={d_model}, H={n_heads})")

    # small self-attention: fused QKV path, single attention tile
    check(2, 8, 32, 4, self_attn=True, seed=0)
    # small cross-attention-style call (distinct q/k/v tensors): separate projections
    check(2, 8, 32, 4, self_attn=False, seed=0)
    # larger shape exercising row tiling, query/key tiling and online softmax
    check(2, 1024, 128, 4, self_attn=True, seed=0)

    print("KERNEL_OK")
</pallas_src>

<mosaic_0001>
module attributes {stable_mosaic.version = 11 : i64} {
  func.func @_qkv_headmajor_kernel(%arg0: i32, %arg1: i32, %arg2: memref<1x8x32xf32, #tpu.memory_space<vmem>>, %arg3: memref<32x32xf32, #tpu.memory_space<vmem>>, %arg4: memref<32x32xf32, #tpu.memory_space<vmem>>, %arg5: memref<32x32xf32, #tpu.memory_space<vmem>>, %arg6: memref<1x32xf32, #tpu.memory_space<vmem>>, %arg7: memref<1x32xf32, #tpu.memory_space<vmem>>, %arg8: memref<1x32xf32, #tpu.memory_space<vmem>>, %arg9: memref<1x4x8x8xbf16, #tpu.memory_space<vmem>>, %arg10: memref<1x4x8x8xbf16, #tpu.memory_space<vmem>>, %arg11: memref<1x4x8x8xbf16, #tpu.memory_space<vmem>>) attributes {dimension_semantics = [#tpu.dimension_semantics<parallel>, #tpu.dimension_semantics<parallel>], iteration_bounds = array<i64: 2, 1>, scalar_prefetch = 0 : i64, scratch_operands = 0 : i64, tpu.core_type = #tpu.core_type<tc>, window_params = [{transform_indices = @transform_0, window_bounds = array<i64: 1, 8, 32>}, {pipeline_mode = #tpu.pipeline_mode<synchronous>, transform_indices = @transform_1, window_bounds = array<i64: 32, 32>}, {pipeline_mode = #tpu.pipeline_mode<synchronous>, transform_indices = @transform_2, window_bounds = array<i64: 32, 32>}, {pipeline_mode = #tpu.pipeline_mode<synchronous>, transform_indices = @transform_3, window_bounds = array<i64: 32, 32>}, {pipeline_mode = #tpu.pipeline_mode<synchronous>, transform_indices = @transform_4, window_bounds = array<i64: 1, 32>}, {pipeline_mode = #tpu.pipeline_mode<synchronous>, transform_indices = @transform_5, window_bounds = array<i64: 1, 32>}, {pipeline_mode = #tpu.pipeline_mode<synchronous>, transform_indices = @transform_6, window_bounds = array<i64: 1, 32>}, {transform_indices = @transform_7, window_bounds = array<i64: 1, 4, 8, 8>}, {transform_indices = @transform_8, window_bounds = array<i64: 1, 4, 8, 8>}, {transform_indices = @transform_9, window_bounds = array<i64: 1, 4, 8, 8>}]} {
    %c0 = arith.constant 0 : index
    %c0_0 = arith.constant 0 : index
    %c0_1 = arith.constant 0 : index
    %0 = vector.load %arg2[%c0, %c0_0, %c0_1] : memref<1x8x32xf32, #tpu.memory_space<vmem>>, vector<1x8x32xf32>
    %1 = vector.shape_cast %0 : vector<1x8x32xf32> to vector<8x32xf32>
    %c0_2 = arith.constant 0 : index
    %c0_3 = arith.constant 0 : index
    %2 = vector.load %arg3[%c0_2, %c0_3] : memref<32x32xf32, #tpu.memory_space<vmem>>, vector<32x32xf32>
    %cst = arith.constant dense<0.000000e+00> : vector<8x32xf32>
    %3 = tpu.matmul %1, %2, %cst {dimension_numbers = #tpu.dot_dimension_numbers<[1], [0], [0], [1], [0, 0, 1, 1], [], []>} : vector<8x32xf32>, vector<32x32xf32>, vector<8x32xf32> -> vector<8x32xf32>
    %c0_4 = arith.constant 0 : index
    %c0_5 = arith.constant 0 : index
    %4 = vector.load %arg6[%c0_4, %c0_5] : memref<1x32xf32, #tpu.memory_space<vmem>>, vector<1x32xf32>
    %5 = vector.broadcast %4 : vector<1x32xf32> to vector<8x32xf32>
    %6 = arith.addf %3, %5 : vector<8x32xf32>
    %c0_6 = arith.constant 0 : index
    %c0_7 = arith.constant 0 : index
    %7 = vector.load %arg4[%c0_6, %c0_7] : memref<32x32xf32, #tpu.memory_space<vmem>>, vector<32x32xf32>
    %cst_8 = arith.constant dense<0.000000e+00> : vector<8x32xf32>
    %8 = tpu.matmul %1, %7, %cst_8 {dimension_numbers = #tpu.dot_dimension_numbers<[1], [0], [0], [1], [0, 0, 1, 1], [], []>} : vector<8x32xf32>, vector<32x32xf32>, vector<8x32xf32> -> vector<8x32xf32>
    %c0_9 = arith.constant 0 : index
    %c0_10 = arith.constant 0 : index
    %9 = vector.load %arg7[%c0_9, %c0_10] : memref<1x32xf32, #tpu.memory_space<vmem>>, vector<1x32xf32>
    %10 = vector.broadcast %9 : vector<1x32xf32> to vector<8x32xf32>
    %11 = arith.addf %8, %10 : vector<8x32xf32>
    %c0_11 = arith.constant 0 : index
    %c0_12 = arith.constant 0 : index
    %12 = vector.load %arg5[%c0_11, %c0_12] : memref<32x32xf32, #tpu.memory_space<vmem>>, vector<32x32xf32>
    %cst_13 = arith.constant dense<0.000000e+00> : vector<8x32xf32>
    %13 = tpu.matmul %1, %12, %cst_13 {dimension_numbers = #tpu.dot_dimension_numbers<[1], [0], [0], [1], [0, 0, 1, 1], [], []>} : vector<8x32xf32>, vector<32x32xf32>, vector<8x32xf32> -> vector<8x32xf32>
    %c0_14 = arith.constant 0 : index
    %c0_15 = arith.constant 0 : index
    %14 = vector.load %arg8[%c0_14, %c0_15] : memref<1x32xf32, #tpu.memory_space<vmem>>, vector<1x32xf32>
    %15 = vector.broadcast %14 : vector<1x32xf32> to vector<8x32xf32>
    %16 = arith.addf %13, %15 : vector<8x32xf32>
    %17 = vector.extract_strided_slice %6 {offsets = [0, 0], sizes = [8, 8], strides = [1, 1]} : vector<8x32xf32> to vector<8x8xf32>
    %18 = arith.truncf %17 : vector<8x8xf32> to vector<8x8xbf16>
    %c0_16 = arith.constant 0 : index
    %c0_17 = arith.constant 0 : index
    %c0_18 = arith.constant 0 : index
    %c0_19 = arith.constant 0 : index
    %19 = vector.load %arg9[%c0_16, %c0_17, %c0_18, %c0_19] : memref<1x4x8x8xbf16, #tpu.memory_space<vmem>>, vector<1x1x8x8xbf16>
    %20 = vector.shape_cast %19 : vector<1x1x8x8xbf16> to vector<8x8xbf16>
    %21 = vector.shape_cast %18 : vector<8x8xbf16> to vector<1x1x8x8xbf16>
    tpu.vector_store %arg9[%c0_16, %c0_17, %c0_18, %c0_19], %21 {strides = array<i32>} : memref<1x4x8x8xbf16, #tpu.memory_space<vmem>>, vector<1x1x8x8xbf16>,
    %22 = vector.extract_strided_slice %11 {offsets = [0, 0], sizes = [8, 8], strides = [1, 1]} : vector<8x32xf32> to vector<8x8xf32>
    %23 = arith.truncf %22 : vector<8x8xf32> to vector<8x8xbf16>
    %c0_20 = arith.constant 0 : index
    %c0_21 = arith.constant 0 : index
    %c0_22 = arith.constant 0 : index
    %c0_23 = arith.constant 0 : index
    %24 = vector.load %arg10[%c0_20, %c0_21, %c0_22, %c0_23] : memref<1x4x8x8xbf16, #tpu.memory_space<vmem>>, vector<1x1x8x8xbf16>
    %25 = vector.shape_cast %24 : vector<1x1x8x8xbf16> to vector<8x8xbf16>
    %26 = vector.shape_cast %23 : vector<8x8xbf16> to vector<1x1x8x8xbf16>
    tpu.vector_store %arg10[%c0_20, %c0_21, %c0_22, %c0_23], %26 {strides = array<i32>} : memref<1x4x8x8xbf16, #tpu.memory_space<vmem>>, vector<1x1x8x8xbf16>,
    %27 = vector.extract_strided_slice %16 {offsets = [0, 0], sizes = [8, 8], strides = [1, 1]} : vector<8x32xf32> to vector<8x8xf32>
    %28 = arith.truncf %27 : vector<8x8xf32> to vector<8x8xbf16>
    %c0_24 = arith.constant 0 : index
    %c0_25 = arith.constant 0 : index
    %c0_26 = arith.constant 0 : index
    %c0_27 = arith.constant 0 : index
    %29 = vector.load %arg11[%c0_24, %c0_25, %c0_26, %c0_27] : memref<1x4x8x8xbf16, #tpu.memory_space<vmem>>, vector<1x1x8x8xbf16>
    %30 = vector.shape_cast %29 : vector<1x1x8x8xbf16> to vector<8x8xbf16>
    %31 = vector.shape_cast %28 : vector<8x8xbf16> to vector<1x1x8x8xbf16>
    tpu.vector_store %arg11[%c0_24, %c0_25, %c0_26, %c0_27], %31 {strides = array<i32>} : memref<1x4x8x8xbf16, #tpu.memory_space<vmem>>, vector<1x1x8x8xbf16>,
    %32 = vector.extract_strided_slice %6 {offsets = [0, 8], sizes = [8, 8], strides = [1, 1]} : vector<8x32xf32> to vector<8x8xf32>
    %33 = arith.truncf %32 : vector<8x8xf32> to vector<8x8xbf16>
    %c0_28 = arith.constant 0 : index
    %c1 = arith.constant 1 : index
    %c0_29 = arith.constant 0 : index
    %c0_30 = arith.constant 0 : index
    %34 = vector.load %arg9[%c0_28, %c1, %c0_29, %c0_30] : memref<1x4x8x8xbf16, #tpu.memory_space<vmem>>, vector<1x1x8x8xbf16>
    %35 = vector.shape_cast %34 : vector<1x1x8x8xbf16> to vector<8x8xbf16>
    %36 = vector.shape_cast %33 : vector<8x8xbf16> to vector<1x1x8x8xbf16>
    tpu.vector_store %arg9[%c0_28, %c1, %c0_29, %c0_30], %36 {strides = array<i32>} : memref<1x4x8x8xbf16, #tpu.memory_space<vmem>>, vector<1x1x8x8xbf16>,
    %37 = vector.extract_strided_slice %11 {offsets = [0, 8], sizes = [8, 8], strides = [1, 1]} : vector<8x32xf32> to vector<8x8xf32>
    %38 = arith.truncf %37 : vector<8x8xf32> to vector<8x8xbf16>
    %c0_31 = arith.constant 0 : index
    %c1_32 = arith.constant 1 : index
    %c0_33 = arith.constant 0 : index
    %c0_34 = arith.constant 0 : index
    %39 = vector.load %arg10[%c0_31, %c1_32, %c0_33, %c0_34] : memref<1x4x8x8xbf16, #tpu.memory_space<vmem>>, vector<1x1x8x8xbf16>
    %40 = vector.shape_cast %39 : vector<1x1x8x8xbf16> to vector<8x8xbf16>
    %41 = vector.shape_cast %38 : vector<8x8xbf16> to vector<1x1x8x8xbf16>
    tpu.vector_store %arg10[%c0_31, %c1_32, %c0_33, %c0_34], %41 {strides = array<i32>} : memref<1x4x8x8xbf16, #tpu.memory_space<vmem>>, vector<1x1x8x8xbf16>,
    %42 = vector.extract_strided_slice %16 {offsets = [0, 8], sizes = [8, 8], strides = [1, 1]} : vector<8x32xf32> to vector<8x8xf32>
    %43 = arith.truncf %42 : vector<8x8xf32> to vector<8x8xbf16>
    %c0_35 = arith.constant 0 : index
    %c1_36 = arith.constant 1 : index
    %c0_37 = arith.constant 0 : index
    %c0_38 = arith.constant 0 : index
    %44 = vector.load %arg11[%c0_35, %c1_36, %c0_37, %c0_38] : memref<1x4x8x8xbf16, #tpu.memory_space<vmem>>, vector<1x1x8x8xbf16>
    %45 = vector.shape_cast %44 : vector<1x1x8x8xbf16> to vector<8x8xbf16>
    %46 = vector.shape_cast %43 : vector<8x8xbf16> to vector<1x1x8x8xbf16>
    tpu.vector_store %arg11[%c0_35, %c1_36, %c0_37, %c0_38], %46 {strides = array<i32>} : memref<1x4x8x8xbf16, #tpu.memory_space<vmem>>, vector<1x1x8x8xbf16>,
    %47 = vector.extract_strided_slice %6 {offsets = [0, 16], sizes = [8, 8], strides = [1, 1]} : vector<8x32xf32> to vector<8x8xf32>
    %48 = arith.truncf %47 : vector<8x8xf32> to vector<8x8xbf16>
    %c0_39 = arith.constant 0 : index
    %c2 = arith.constant 2 : index
    %c0_40 = arith.constant 0 : index
    %c0_41 = arith.constant 0 : index
    %49 = vector.load %arg9[%c0_39, %c2, %c0_40, %c0_41] : memref<1x4x8x8xbf16, #tpu.memory_space<vmem>>, vector<1x1x8x8xbf16>
    %50 = vector.shape_cast %49 : vector<1x1x8x8xbf16> to vector<8x8xbf16>
    %51 = vector.shape_cast %48 : vector<8x8xbf16> to vector<1x1x8x8xbf16>
    tpu.vector_store %arg9[%c0_39, %c2, %c0_40, %c0_41], %51 {strides = array<i32>} : memref<1x4x8x8xbf16, #tpu.memory_space<vmem>>, vector<1x1x8x8xbf16>,
    %52 = vector.extract_strided_slice %11 {offsets = [0, 16], sizes = [8, 8], strides = [1, 1]} : vector<8x32xf32> to vector<8x8xf32>
    %53 = arith.truncf %52 : vector<8x8xf32> to vector<8x8xbf16>
    %c0_42 = arith.constant 0 : index
    %c2_43 = arith.constant 2 : index
    %c0_44 = arith.constant 0 : index
    %c0_45 = arith.constant 0 : index
    %54 = vector.load %arg10[%c0_42, %c2_43, %c0_44, %c0_45] : memref<1x4x8x8xbf16, #tpu.memory_space<vmem>>, vector<1x1x8x8xbf16>
    %55 = vector.shape_cast %54 : vector<1x1x8x8xbf16> to vector<8x8xbf16>
    %56 = vector.shape_cast %53 : vector<8x8xbf16> to vector<1x1x8x8xbf16>
    tpu.vector_store %arg10[%c0_42, %c2_43, %c0_44, %c0_45], %56 {strides = array<i32>} : memref<1x4x8x8xbf16, #tpu.memory_space<vmem>>, vector<1x1x8x8xbf16>,
    %57 = vector.extract_strided_slice %16 {offsets = [0, 16], sizes = [8, 8], strides = [1, 1]} : vector<8x32xf32> to vector<8x8xf32>
    %58 = arith.truncf %57 : vector<8x8xf32> to vector<8x8xbf16>
    %c0_46 = arith.constant 0 : index
    %c2_47 = arith.constant 2 : index
    %c0_48 = arith.constant 0 : index
    %c0_49 = arith.constant 0 : index
    %59 = vector.load %arg11[%c0_46, %c2_47, %c0_48, %c0_49] : memref<1x4x8x8xbf16, #tpu.memory_space<vmem>>, vector<1x1x8x8xbf16>
    %60 = vector.shape_cast %59 : vector<1x1x8x8xbf16> to vector<8x8xbf16>
    %61 = vector.shape_cast %58 : vector<8x8xbf16> to vector<1x1x8x8xbf16>
    tpu.vector_store %arg11[%c0_46, %c2_47, %c0_48, %c0_49], %61 {strides = array<i32>} : memref<1x4x8x8xbf16, #tpu.memory_space<vmem>>, vector<1x1x8x8xbf16>,
    %62 = vector.extract_strided_slice %6 {offsets = [0, 24], sizes = [8, 8], strides = [1, 1]} : vector<8x32xf32> to vector<8x8xf32>
    %63 = arith.truncf %62 : vector<8x8xf32> to vector<8x8xbf16>
    %c0_50 = arith.constant 0 : index
    %c3 = arith.constant 3 : index
    %c0_51 = arith.constant 0 : index
    %c0_52 = arith.constant 0 : index
    %64 = vector.load %arg9[%c0_50, %c3, %c0_51, %c0_52] : memref<1x4x8x8xbf16, #tpu.memory_space<vmem>>, vector<1x1x8x8xbf16>
    %65 = vector.shape_cast %64 : vector<1x1x8x8xbf16> to vector<8x8xbf16>
    %66 = vector.shape_cast %63 : vector<8x8xbf16> to vector<1x1x8x8xbf16>
    tpu.vector_store %arg9[%c0_50, %c3, %c0_51, %c0_52], %66 {strides = array<i32>} : memref<1x4x8x8xbf16, #tpu.memory_space<vmem>>, vector<1x1x8x8xbf16>,
    %67 = vector.extract_strided_slice %11 {offsets = [0, 24], sizes = [8, 8], strides = [1, 1]} : vector<8x32xf32> to vector<8x8xf32>
    %68 = arith.truncf %67 : vector<8x8xf32> to vector<8x8xbf16>
    %c0_53 = arith.constant 0 : index
    %c3_54 = arith.constant 3 : index
    %c0_55 = arith.constant 0 : index
    %c0_56 = arith.constant 0 : index
    %69 = vector.load %arg10[%c0_53, %c3_54, %c0_55, %c0_56] : memref<1x4x8x8xbf16, #tpu.memory_space<vmem>>, vector<1x1x8x8xbf16>
    %70 = vector.shape_cast %69 : vector<1x1x8x8xbf16> to vector<8x8xbf16>
    %71 = vector.shape_cast %68 : vector<8x8xbf16> to vector<1x1x8x8xbf16>
    tpu.vector_store %arg10[%c0_53, %c3_54, %c0_55, %c0_56], %71 {strides = array<i32>} : memref<1x4x8x8xbf16, #tpu.memory_space<vmem>>, vector<1x1x8x8xbf16>,
    %72 = vector.extract_strided_slice %16 {offsets = [0, 24], sizes = [8, 8], strides = [1, 1]} : vector<8x32xf32> to vector<8x8xf32>
    %73 = arith.truncf %72 : vector<8x8xf32> to vector<8x8xbf16>
    %c0_57 = arith.constant 0 : index
    %c3_58 = arith.constant 3 : index
    %c0_59 = arith.constant 0 : index
    %c0_60 = arith.constant 0 : index
    %74 = vector.load %arg11[%c0_57, %c3_58, %c0_59, %c0_60] : memref<1x4x8x8xbf16, #tpu.memory_space<vmem>>, vector<1x1x8x8xbf16>
    %75 = vector.shape_cast %74 : vector<1x1x8x8xbf16> to vector<8x8xbf16>
    %76 = vector.shape_cast %73 : vector<8x8xbf16> to vector<1x1x8x8xbf16>
    tpu.vector_store %arg11[%c0_57, %c3_58, %c0_59, %c0_60], %76 {strides = array<i32>} : memref<1x4x8x8xbf16, #tpu.memory_space<vmem>>, vector<1x1x8x8xbf16>,
    return
  }
  func.func @transform_0(%arg0: i32, %arg1: i32) -> (i32, i32, i32) {
    %c0_i32 = arith.constant 0 : i32
    %c0_i32_0 = arith.constant 0 : i32
    return %arg0, %arg1, %c0_i32 : i32, i32, i32
  }
  func.func @transform_1(%arg0: i32, %arg1: i32) -> (i32, i32) {
    %c0_i32 = arith.constant 0 : i32
    %c0_i32_0 = arith.constant 0 : i32
    %c0_i32_1 = arith.constant 0 : i32
    return %c0_i32, %c0_i32_0 : i32, i32
  }
  func.func @transform_2(%arg0: i32, %arg1: i32) -> (i32, i32) {
    %c0_i32 = arith.constant 0 : i32
    %c0_i32_0 = arith.constant 0 : i32
    %c0_i32_1 = arith.constant 0 : i32
    return %c0_i32, %c0_i32_0 : i32, i32
  }
  func.func @transform_3(%arg0: i32, %arg1: i32) -> (i32, i32) {
    %c0_i32 = arith.constant 0 : i32
    %c0_i32_0 = arith.constant 0 : i32
    %c0_i32_1 = arith.constant 0 : i32
    return %c0_i32, %c0_i32_0 : i32, i32
  }
  func.func @transform_4(%arg0: i32, %arg1: i32) -> (i32, i32) {
    %c0_i32 = arith.constant 0 : i32
    %c0_i32_0 = arith.constant 0 : i32
    %c0_i32_1 = arith.constant 0 : i32
    return %c0_i32, %c0_i32_0 : i32, i32
  }
  func.func @transform_5(%arg0: i32, %arg1: i32) -> (i32, i32) {
    %c0_i32 = arith.constant 0 : i32
    %c0_i32_0 = arith.constant 0 : i32
    %c0_i32_1 = arith.constant 0 : i32
    return %c0_i32, %c0_i32_0 : i32, i32
  }
  func.func @transform_6(%arg0: i32, %arg1: i32) -> (i32, i32) {
    %c0_i32 = arith.constant 0 : i32
    %c0_i32_0 = arith.constant 0 : i32
    %c0_i32_1 = arith.constant 0 : i32
    return %c0_i32, %c0_i32_0 : i32, i32
  }
  func.func @transform_7(%arg0: i32, %arg1: i32) -> (i32, i32, i32, i32) {
    %c0_i32 = arith.constant 0 : i32
    %c0_i32_0 = arith.constant 0 : i32
    %c0_i32_1 = arith.constant 0 : i32
    return %arg0, %c0_i32, %arg1, %c0_i32_0 : i32, i32, i32, i32
  }
  func.func @transform_8(%arg0: i32, %arg1: i32) -> (i32, i32, i32, i32) {
    %c0_i32 = arith.constant 0 : i32
    %c0_i32_0 = arith.constant 0 : i32
    %c0_i32_1 = arith.constant 0 : i32
    return %arg0, %c0_i32, %arg1, %c0_i32_0 : i32, i32, i32, i32
  }
  func.func @transform_9(%arg0: i32, %arg1: i32) -> (i32, i32, i32, i32) {
    %c0_i32 = arith.constant 0 : i32
    %c0_i32_0 = arith.constant 0 : i32
    %c0_i32_1 = arith.constant 0 : i32
    return %arg0, %c0_i32, %arg1, %c0_i32_0 : i32, i32, i32, i32
  }
}

</mosaic_0001>

<llo_original>
// kernel: tpu_custom_call.1
$region0: #{tpu_custom_call.1}
  #allocation0 [shape = 'u32[]', space=smem, size = 0x4, offset = 0x4, fixed_abs, tag = 'smem constant byte address 0x4 - core index']
  #allocation1 [shape = 'u32[144,128]{1,0:T(1,128)}', space=vmem, size = 0x12000, scoped, tag = 'internal scratch']
  %s0 = inlined_call_operand.hbm [shape: f32[2,8,32], index: 0, kind: input, shape index: {}]
  %s1 = inlined_call_operand.hbm [shape: f32[32,32], index: 1, kind: input, shape index: {}]
  %s2 = inlined_call_operand.hbm [shape: f32[32,32], index: 2, kind: input, shape index: {}]
  %s3 = inlined_call_operand.hbm [shape: f32[32,32], index: 3, kind: input, shape index: {}]
  %s4 = inlined_call_operand.hbm [shape: f32[1,32], index: 4, kind: input, shape index: {}]
  %s5 = inlined_call_operand.hbm [shape: f32[1,32], index: 5, kind: input, shape index: {}]
  %s6 = inlined_call_operand.hbm [shape: f32[1,32], index: 6, kind: input, shape index: {}]
  %s7 = inlined_call_operand.hbm [shape: bf16[2,4,8,8], index: 7, kind: output, shape index: {0}]
  %s8 = inlined_call_operand.hbm [shape: bf16[2,4,8,8], index: 8, kind: output, shape index: {1}]
  %s9 = inlined_call_operand.hbm [shape: bf16[2,4,8,8], index: 9, kind: output, shape index: {2}]
  %10 = xla_tuple %s7, %s8, %s9
  %s11 = sld [smem:[#allocation0]]
  $region105: #{tpu_custom_call.1} parent=0
    _
  %s13 = ssub.s32 1, %s11
  %s14 = scalar_select 0, %s13, %s11
  $region1: #{tpu_custom_call.1} parent=0
    #allocation2 [shape = 'u8[8192]{0}', space=vmem, size = 0x2000, scoped, tag = 'input window, operand 0']
    #allocation3 [shape = 's32[2]{0}', space=sflag, size = 0x8, scoped, tag = 'scoped memory for tpu_custom_call.1']
    #allocation4 [shape = 's32[2]{0}', space=sflag, size = 0x8, scoped, tag = 'scoped memory for tpu_custom_call.1']
    #allocation5 [shape = 'u8[16384]{0}', space=vmem, size = 0x4000, scoped, tag = 'input window, operand 1, single buffered']
    #allocation6 [shape = 's32[1]{0}', space=sflag, size = 0x4, scoped, tag = 'scoped memory for tpu_custom_call.1']
    #allocation7 [shape = 'u8[16384]{0}', space=vmem, size = 0x4000, scoped, tag = 'input window, operand 2, single buffered']
    #allocation8 [shape = 'u8[16384]{0}', space=vmem, size = 0x4000, scoped, tag = 'input window, operand 3, single buffered']
    #allocation9 [shape = 's32[1]{0}', space=sflag, size = 0x4, scoped, tag = 'scoped memory for tpu_custom_call.1']
    #allocation10 [shape = 'u8[512]{0}', space=vmem, size = 0x400, scoped, tag = 'input window, operand 4, single buffered']
    #allocation11 [shape = 'u8[512]{0}', space=vmem, size = 0x400, scoped, tag = 'input window, operand 5, single buffered']
    #allocation12 [shape = 's32[1]{0}', space=sflag, size = 0x4, scoped, tag = 'scoped memory for tpu_custom_call.1']
    #allocation13 [shape = 'u8[512]{0}', space=vmem, size = 0x400, scoped, tag = 'input window, operand 6, single buffered']
    #allocation14 [shape = 'u8[16384]{0}', space=vmem, size = 0x4000, scoped, tag = 'output window, operand 0']
    #allocation15 [shape = 'u8[16384]{0}', space=vmem, size = 0x4000, scoped, tag = 'output window, operand 1']
    #allocation16 [shape = 's32[2]{0}', space=sflag, size = 0x8, scoped, tag = 'scoped memory for tpu_custom_call.1']
    #allocation17 [shape = 'u8[16384]{0}', space=vmem, size = 0x4000, scoped, tag = 'output window, operand 2']
    %15 = vsyncpa [#allocation3], 0
    %s16 = scalar_lea.sflag [#allocation3], 1
    %17 = vsyncpa %s16, 0
    %18 = vsyncpa [#allocation6], 0
    %19 = vsyncpa [#allocation9], 0
    %20 = vsyncpa [#allocation12], 0
    %21 = vsyncpa [#allocation4], 0
    %s22 = scalar_lea.sflag [#allocation4], 1
    %23 = vsyncpa %s22, 0
    %24 = vsyncpa [#allocation16], 0
    %s25 = scalar_lea.sflag [#allocation16], 1
    %26 = vsyncpa %s25, 0
    loop: start=0, step=1, limit=4
    $region2: #{tpu_custom_call.1} parent=1 // loop_pre_header
      _
    $region3: #{tpu_custom_call.1} parent=1 // loop_header
      %s28 = sphi 0, %s32
      %p29 = scmp.ge.s32.totalorder %s28, 4
      %s35 = sphi 0, %s47
      %s36 = sphi 0, %s43
      %s37 = sphi 0, %s35
      %s38 = sphi 0, %s36
      %s39 = sphi 0, %s37
      %s40 = sphi 0, %s38
      %s52 = sphi 0, %s54
      %s55 = sphi 0, %s52
      %s56 = sphi 0, %s55
      %s72 = sphi 0, %s56
      %s76 = sphi 0, %s76
      %s78 = sphi 0, %s76
      %s79 = sphi 0, %s78
      %s93 = sphi 0, %s79
      %s97 = sphi 0, %s97
      %s99 = sphi 0, %s97
      %s100 = sphi 0, %s99
      %s114 = sphi 0, %s100
      %s118 = sphi 0, %s118
      %s120 = sphi 0, %s118
      %s121 = sphi 0, %s120
      %s135 = sphi 0, %s121
      %s139 = sphi 0, %s139
      %s141 = sphi 0, %s139
      %s142 = sphi 0, %s141
      %s156 = sphi 0, %s142
      %s160 = sphi 0, %s160
      %s162 = sphi 0, %s160
      %s163 = sphi 0, %s162
      %s177 = sphi 0, %s163
      %s181 = sphi 0, %s181
      %s183 = sphi 0, %s181
      %s184 = sphi 0, %s183
      %s198 = sphi 0, %s184
      %s206 = sphi 0, %s208
      %s209 = sphi 0, %s206
      %s210 = sphi 0, %s209
      %s226 = sphi 0, %s210
      %s234 = sphi 0, %s236
      %s237 = sphi 0, %s234
      %s238 = sphi 0, %s237
      %s254 = sphi 0, %s238
      %s262 = sphi 0, %s264
      %s265 = sphi 0, %s262
      %s266 = sphi 0, %s265
      %s282 = sphi 0, %s266
    $region4: #{tpu_custom_call.1} parent=1 // loop_header_branch
      %31 = sbr.rel (%p29) target = $region8
    $region5: #{tpu_custom_call.1} parent=1 // loop_body
      %s33 = ssub.s32 %s28, 1
      %s34 = ssub.s32 %s28, 2
      %s41 = sadd.s32 1, %s36
      %p42 = scmp.ge.s32.totalorder %s41, 1
      %s43 = scalar_select %p42, 0, %s41
      %s44 = sadd.s32 1, %s35
      %s45 = scalar_select %p42, %s44, %s35
      %p46 = scmp.ge.s32.totalorder %s45, 2
      %s47 = scalar_select %p46, 0, %s45
      %s48 = ssub.s32 %s35, %s47
      %s49 = ssub.s32 %s36, %s43
      %s50 = sor.u32 %s48, %s49
      %p51 = scmp.eq.s32.totalorder %s50, 0
      %s53 = sadd.s32 %s52, 1
      %s54 = scalar_select %p51, %s52, %s53
      %p57 = pneg %p51
      %p58 = scmp.eq.s32.totalorder %s28, 1
      %p59 = por %p57, %p58
      %p60 = scmp.ne.s32.totalorder %s52, %s55
      %p61 = scmp.eq.s32.totalorder %s28, 0
      %p62 = por %p60, %p61
      %p63 = scmp.ne.s32.totalorder %s52, %s55
      %p64 = scmp.eq.s32.totalorder %s33, 1
      %p65 = por %p63, %p64
      %p66 = scmp.ne.s32.totalorder %s55, %s56
      %p67 = scmp.eq.s32.totalorder %s33, 0
      %p68 = por %p66, %p67
      %p69 = scmp.ne.s32.totalorder %s55, %s56
      %p70 = scmp.eq.s32.totalorder %s34, 1
      %p71 = por %p69, %p70
      %p73 = scmp.ne.s32.totalorder %s56, %s72
      %p74 = scmp.eq.s32.totalorder %s34, 0
      %p75 = por %p73, %p74
      %s77 = sadd.s32 %s76, 1
      %p80 = scmp.eq.s32.totalorder %s28, 1
      %p81 = scmp.ne.s32.totalorder %s76, %s78
      %p82 = scmp.eq.s32.totalorder %s28, 0
      %p83 = por %p81, %p82
      %p84 = scmp.ne.s32.totalorder %s76, %s78
      %p85 = scmp.eq.s32.totalorder %s33, 1
      %p86 = por %p84, %p85
      %p87 = scmp.ne.s32.totalorder %s78, %s79
      %p88 = scmp.eq.s32.totalorder %s33, 0
      %p89 = por %p87, %p88
      %p90 = scmp.ne.s32.totalorder %s78, %s79
      %p91 = scmp.eq.s32.totalorder %s34, 1
      %p92 = por %p90, %p91
      %p94 = scmp.ne.s32.totalorder %s79, %s93
      %p95 = scmp.eq.s32.totalorder %s34, 0
      %p96 = por %p94, %p95
      %s98 = sadd.s32 %s97, 1
      %p101 = scmp.eq.s32.totalorder %s28, 1
      %p102 = scmp.ne.s32.totalorder %s97, %s99
      %p103 = scmp.eq.s32.totalorder %s28, 0
      %p104 = por %p102, %p103
      %p105 = scmp.ne.s32.totalorder %s97, %s99
      %p106 = scmp.eq.s32.totalorder %s33, 1
      %p107 = por %p105, %p106
      %p108 = scmp.ne.s32.totalorder %s99, %s100
      %p109 = scmp.eq.s32.totalorder %s33, 0
      %p110 = por %p108, %p109
      %p111 = scmp.ne.s32.totalorder %s99, %s100
      %p112 = scmp.eq.s32.totalorder %s34, 1
      %p113 = por %p111, %p112
      %p115 = scmp.ne.s32.totalorder %s100, %s114
      %p116 = scmp.eq.s32.totalorder %s34, 0
      %p117 = por %p115, %p116
      %s119 = sadd.s32 %s118, 1
      %p122 = scmp.eq.s32.totalorder %s28, 1
      %p123 = scmp.ne.s32.totalorder %s118, %s120
      %p124 = scmp.eq.s32.totalorder %s28, 0
      %p125 = por %p123, %p124
      %p126 = scmp.ne.s32.totalorder %s118, %s120
      %p127 = scmp.eq.s32.totalorder %s33, 1
      %p128 = por %p126, %p127
      %p129 = scmp.ne.s32.totalorder %s120, %s121
      %p130 = scmp.eq.s32.totalorder %s33, 0
      %p131 = por %p129, %p130
      %p132 = scmp.ne.s32.totalorder %s120, %s121
      %p133 = scmp.eq.s32.totalorder %s34, 1
      %p134 = por %p132, %p133
      %p136 = scmp.ne.s32.totalorder %s121, %s135
      %p137 = scmp.eq.s32.totalorder %s34, 0
      %p138 = por %p136, %p137
      %s140 = sadd.s32 %s139, 1
      %p143 = scmp.eq.s32.totalorder %s28, 1
      %p144 = scmp.ne.s32.totalorder %s139, %s141
      %p145 = scmp.eq.s32.totalorder %s28, 0
      %p146 = por %p144, %p145
      %p147 = scmp.ne.s32.totalorder %s139, %s141
      %p148 = scmp.eq.s32.totalorder %s33, 1
      %p149 = por %p147, %p148
      %p150 = scmp.ne.s32.totalorder %s141, %s142
      %p151 = scmp.eq.s32.totalorder %s33, 0
      %p152 = por %p150, %p151
      %p153 = scmp.ne.s32.totalorder %s141, %s142
      %p154 = scmp.eq.s32.totalorder %s34, 1
      %p155 = por %p153, %p154
      %p157 = scmp.ne.s32.totalorder %s142, %s156
      %p158 = scmp.eq.s32.totalorder %s34, 0
      %p159 = por %p157, %p158
      %s161 = sadd.s32 %s160, 1
      %p164 = scmp.eq.s32.totalorder %s28, 1
      %p165 = scmp.ne.s32.totalorder %s160, %s162
      %p166 = scmp.eq.s32.totalorder %s28, 0
      %p167 = por %p165, %p166
      %p168 = scmp.ne.s32.totalorder %s160, %s162
      %p169 = scmp.eq.s32.totalorder %s33, 1
      %p170 = por %p168, %p169
      %p171 = scmp.ne.s32.totalorder %s162, %s163
      %p172 = scmp.eq.s32.totalorder %s33, 0
      %p173 = por %p171, %p172
      %p174 = scmp.ne.s32.totalorder %s162, %s163
      %p175 = scmp.eq.s32.totalorder %s34, 1
      %p176 = por %p174, %p175
      %p178 = scmp.ne.s32.totalorder %s163, %s177
      %p179 = scmp.eq.s32.totalorder %s34, 0
      %p180 = por %p178, %p179
      %s182 = sadd.s32 %s181, 1
      %p185 = scmp.eq.s32.totalorder %s28, 1
      %p186 = scmp.ne.s32.totalorder %s181, %s183
      %p187 = scmp.eq.s32.totalorder %s28, 0
      %p188 = por %p186, %p187
      %p189 = scmp.ne.s32.totalorder %s181, %s183
      %p190 = scmp.eq.s32.totalorder %s33, 1
      %p191 = por %p189, %p190
      %p192 = scmp.ne.s32.totalorder %s183, %s184
      %p193 = scmp.eq.s32.totalorder %s33, 0
      %p194 = por %p192, %p193
      %p195 = scmp.ne.s32.totalorder %s183, %s184
      %p196 = scmp.eq.s32.totalorder %s34, 1
      %p197 = por %p195, %p196
      %p199 = scmp.ne.s32.totalorder %s184, %s198
      %p200 = scmp.eq.s32.totalorder %s34, 0
      %p201 = por %p199, %p200
      %s202 = ssub.s32 %s35, %s47
      %s203 = ssub.s32 %s36, %s43
      %s204 = sor.u32 %s202, %s203
      %p205 = scmp.eq.s32.totalorder %s204, 0
      %s207 = sadd.s32 %s206, 1
      %s208 = scalar_select %p205, %s206, %s207
      %p211 = pneg %p205
      %p212 = scmp.eq.s32.totalorder %s28, 1
      %p213 = por %p211, %p212
      %p214 = scmp.ne.s32.totalorder %s206, %s209
      %p215 = scmp.eq.s32.totalorder %s28, 0
      %p216 = por %p214, %p215
      %p217 = scmp.ne.s32.totalorder %s206, %s209
      %p218 = scmp.eq.s32.totalorder %s33, 1
      %p219 = por %p217, %p218
      %p220 = scmp.ne.s32.totalorder %s209, %s210
      %p221 = scmp.eq.s32.totalorder %s33, 0
      %p222 = por %p220, %p221
      %p223 = scmp.ne.s32.totalorder %s209, %s210
      %p224 = scmp.eq.s32.totalorder %s34, 1
      %p225 = por %p223, %p224
      %p227 = scmp.ne.s32.totalorder %s210, %s226
      %p228 = scmp.eq.s32.totalorder %s34, 0
      %p229 = por %p227, %p228
      %s230 = ssub.s32 %s35, %s47
      %s231 = ssub.s32 %s36, %s43
      %s232 = sor.u32 %s230, %s231
      %p233 = scmp.eq.s32.totalorder %s232, 0
      %s235 = sadd.s32 %s234, 1
      %s236 = scalar_select %p233, %s234, %s235
      %p239 = pneg %p233
      %p240 = scmp.eq.s32.totalorder %s28, 1
      %p241 = por %p239, %p240
      %p242 = scmp.ne.s32.totalorder %s234, %s237
      %p243 = scmp.eq.s32.totalorder %s28, 0
      %p244 = por %p242, %p243
      %p245 = scmp.ne.s32.totalorder %s234, %s237
      %p246 = scmp.eq.s32.totalorder %s33, 1
      %p247 = por %p245, %p246
      %p248 = scmp.ne.s32.totalorder %s237, %s238
      %p249 = scmp.eq.s32.totalorder %s33, 0
      %p250 = por %p248, %p249
      %p251 = scmp.ne.s32.totalorder %s237, %s238
      %p252 = scmp.eq.s32.totalorder %s34, 1
      %p253 = por %p251, %p252
      %p255 = scmp.ne.s32.totalorder %s238, %s254
      %p256 = scmp.eq.s32.totalorder %s34, 0
      %p257 = por %p255, %p256
      %s258 = ssub.s32 %s35, %s47
      %s259 = ssub.s32 %s36, %s43
      %s260 = sor.u32 %s258, %s259
      %p261 = scmp.eq.s32.totalorder %s260, 0
      %s263 = sadd.s32 %s262, 1
      %s264 = scalar_select %p261, %s262, %s263
      %p267 = pneg %p261
      %p268 = scmp.eq.s32.totalorder %s28, 1
      %p269 = por %p267, %p268
      %p270 = scmp.ne.s32.totalorder %s262, %s265
      %p271 = scmp.eq.s32.totalorder %s28, 0
      %p272 = por %p270, %p271
      %p273 = scmp.ne.s32.totalorder %s262, %s265
      %p274 = scmp.eq.s32.totalorder %s33, 1
      %p275 = por %p273, %p274
      %p276 = scmp.ne.s32.totalorder %s265, %s266
      %p277 = scmp.eq.s32.totalorder %s33, 0
      %p278 = por %p276, %p277
      %p279 = scmp.ne.s32.totalorder %s265, %s266
      %p280 = scmp.eq.s32.totalorder %s34, 1
      %p281 = por %p279, %p280
      %p283 = scmp.ne.s32.totalorder %s266, %s282
      %p284 = scmp.eq.s32.totalorder %s34, 0
      %p285 = por %p283, %p284
      %p286 = scmp.le.s32.totalorder 1, %s28
      %p287 = scmp.lt.s32.totalorder %s28, 3
      %p288 = pnand %p286, %p287
      %p289 = pneg %p288
      // Predicated region
      $region9: #{tpu_custom_call.1} parent=5 // pred_check
        _
      $region10: #{tpu_custom_call.1} parent=5 // pred_check_branch
        %291 = sbr.rel (%p288) target = $region12
      $region11: #{tpu_custom_call.1} parent=5 // pred_region
        %s292 = ssub.s32 %s28, 1
        // Predicated region
        $region13: #{tpu_custom_call.1} parent=11 // pred_check
          %p293 = pneg %p89
        $region14: #{tpu_custom_call.1} parent=11 // pred_check_branch
          %295 = sbr.rel (%p293) target = $region16
        $region15: #{tpu_custom_call.1} parent=11 // pred_region
          %s297 = ssub.s32 512, 512
          %298 = vsyncadd [#allocation6], %s297
          %s299 = sshll.u32 [#allocation5], 4
          %s300 = int_to_ptr.vmem [resolvable:$true] %s299
          %305 = dma.hbm_to_vmem [thread:$0]  %s1, 512, %s300, [#allocation6], 128, 128, 8
        $region16: #{tpu_custom_call.1} parent=11 // pred_fallthru
          _
        // Predicated region
        $region17: #{tpu_custom_call.1} parent=11 // pred_check
          %p306 = pneg %p110
        $region18: #{tpu_custom_call.1} parent=11 // pred_check_branch
          %308 = sbr.rel (%p306) target = $region20
        $region19: #{tpu_custom_call.1} parent=11 // pred_region
          %s310 = ssub.s32 512, 512
          %311 = vsyncadd [#allocation6], %s310
          %s312 = sshll.u32 [#allocation7], 4
          %s313 = int_to_ptr.vmem [resolvable:$true] %s312
          %318 = dma.hbm_to_vmem [thread:$0]  %s2, 512, %s313, [#allocation6], 128, 128, 8
        $region20: #{tpu_custom_call.1} parent=11 // pred_fallthru
          _
        // Predicated region
        $region21: #{tpu_custom_call.1} parent=11 // pred_check
          %p319 = pneg %p131
        $region22: #{tpu_custom_call.1} parent=11 // pred_check_branch
          %321 = sbr.rel (%p319) target = $region24
        $region23: #{tpu_custom_call.1} parent=11 // pred_region
          %s323 = ssub.s32 512, 512
          %324 = vsyncadd [#allocation9], %s323
          %s325 = sshll.u32 [#allocation8], 4
          %s326 = int_to_ptr.vmem [resolvable:$true] %s325
          %331 = dma.hbm_to_vmem [thread:$0]  %s3, 512, %s326, [#allocation9], 128, 128, 8
        $region24: #{tpu_custom_call.1} parent=11 // pred_fallthru
          _
        // Predicated region
        $region25: #{tpu_custom_call.1} parent=11 // pred_check
          %p332 = pneg %p152
        $region26: #{tpu_custom_call.1} parent=11 // pred_check_branch
          %334 = sbr.rel (%p332) target = $region28
        $region27: #{tpu_custom_call.1} parent=11 // pred_region
          %s336 = ssub.s32 16, 16
          %337 = vsyncadd [#allocation9], %s336
          %s339 = sshll.u32 [#allocation10], 4
          %s340 = int_to_ptr.vmem [resolvable:$true] %s339
          %342 = dma.hbm_to_vmem [thread:$0]  %s4, 16, %s340, [#allocation9]
        $region28: #{tpu_custom_call.1} parent=11 // pred_fallthru
          _
        // Predicated region
        $region29: #{tpu_custom_call.1} parent=11 // pred_check
          %p343 = pneg %p173
        $region30: #{tpu_custom_call.1} parent=11 // pred_check_branch
          %345 = sbr.rel (%p343) target = $region32
        $region31: #{tpu_custom_call.1} parent=11 // pred_region
          %s347 = ssub.s32 16, 16
          %348 = vsyncadd [#allocation12], %s347
          %s350 = sshll.u32 [#allocation11], 4
          %s351 = int_to_ptr.vmem [resolvable:$true] %s350
          %353 = dma.hbm_to_vmem [thread:$0]  %s5, 16, %s351, [#allocation12]
        $region32: #{tpu_custom_call.1} parent=11 // pred_fallthru
          _
        // Predicated region
        $region33: #{tpu_custom_call.1} parent=11 // pred_check
          %p354 = pneg %p194
        $region34: #{tpu_custom_call.1} parent=11 // pred_check_branch
          %356 = sbr.rel (%p354) target = $region36
        $region35: #{tpu_custom_call.1} parent=11 // pred_region
          %s358 = ssub.s32 16, 16
          %359 = vsyncadd [#allocation12], %s358
          %s361 = sshll.u32 [#allocation13], 4
          %s362 = int_to_ptr.vmem [resolvable:$true] %s361
          %364 = dma.hbm_to_vmem [thread:$0]  %s6, 16, %s362, [#allocation12]
        $region36: #{tpu_custom_call.1} parent=11 // pred_fallthru
          _
      $region12: #{tpu_custom_call.1} parent=5 // pred_fallthru
        _
      %p365 = scmp.lt.s32.totalorder %s28, 2
      // Predicated region
      $region37: #{tpu_custom_call.1} parent=5 // pred_check
        %p366 = pneg %p365
      $region38: #{tpu_custom_call.1} parent=5 // pred_check_branch
        %368 = sbr.rel (%p366) target = $region40
      $region39: #{tpu_custom_call.1} parent=5 // pred_region
        // Predicated region
        $region41: #{tpu_custom_call.1} parent=39 // pred_check
          %p369 = pneg %p62
        $region42: #{tpu_custom_call.1} parent=39 // pred_check_branch
          %371 = sbr.rel (%p369) target = $region44
        $region43: #{tpu_custom_call.1} parent=39 // pred_region
          %s372 = sand.u32 %s52, 1
          %s373 = scalar_lea.sflag [#allocation3], %s372
          %s374 = sand.u32 %s52, 1
          %s375 = smul.addr %s374, 8
          %s376 = scalar_lea.vmem [#allocation2], %s375
          %s378 = ssub.s32 128, 128
          %379 = vsyncadd %s373, %s378
          %s380 = sadd.s32 %s36, %s35
          %s381 = smul.addr %s380, 128
          %s382 = scalar_lea.hbm %s0, %s381
          %s384 = sshll.u32 %s376, 4
          %s385 = int_to_ptr.vmem [resolvable:$true] %s384
          %387 = dma.hbm_to_vmem [thread:$0]  %s382, 128, %s385, %s373
        $region44: #{tpu_custom_call.1} parent=39 // pred_fallthru
          _
      $region40: #{tpu_custom_call.1} parent=5 // pred_fallthru
        _
      %p388 = scmp.le.s32.totalorder 1, %s28
      %p389 = scmp.lt.s32.totalorder %s28, 3
      %p390 = pnand %p388, %p389
      %p391 = pneg %p390
      // Predicated region
      $region45: #{tpu_custom_call.1} parent=5 // pred_check
        _
      $region46: #{tpu_custom_call.1} parent=5 // pred_check_branch
        %393 = sbr.rel (%p390) target = $region48
      $region47: #{tpu_custom_call.1} parent=5 // pred_region
        %s394 = ssub.s32 %s28, 1
        %s395 = sand.u32 %s55, 1
        %s396 = scalar_lea.sflag [#allocation3], %s395
        %s397 = sand.u32 %s55, 1
        %s398 = smul.addr %s397, 8
        %s399 = scalar_lea.vmem [#allocation2], %s398
        // Predicated region
        $region49: #{tpu_custom_call.1} parent=47 // pred_check
          %p400 = pneg %p68
        $region50: #{tpu_custom_call.1} parent=47 // pred_check_branch
          %402 = sbr.rel (%p400) target = $region52
        $region51: #{tpu_custom_call.1} parent=47 // pred_region
          %403 = dma.done %s396, 128
        $region52: #{tpu_custom_call.1} parent=47 // pred_fallthru
          _
        // Predicated region
        $region53: #{tpu_custom_call.1} parent=47 // pred_check
          %p404 = pneg %p89
        $region54: #{tpu_custom_call.1} parent=47 // pred_check_branch
          %406 = sbr.rel (%p404) target = $region56
        $region55: #{tpu_custom_call.1} parent=47 // pred_region
          %407 = dma.done [#allocation6], 512
        $region56: #{tpu_custom_call.1} parent=47 // pred_fallthru
          _
        // Predicated region
        $region57: #{tpu_custom_call.1} parent=47 // pred_check
          %p408 = pneg %p110
        $region58: #{tpu_custom_call.1} parent=47 // pred_check_branch
          %410 = sbr.rel (%p408) target = $region60
        $region59: #{tpu_custom_call.1} parent=47 // pred_region
          %411 = dma.done [#allocation6], 512
        $region60: #{tpu_custom_call.1} parent=47 // pred_fallthru
          _
        // Predicated region
        $region61: #{tpu_custom_call.1} parent=47 // pred_check
          %p412 = pneg %p131
        $region62: #{tpu_custom_call.1} parent=47 // pred_check_branch
          %414 = sbr.rel (%p412) target = $region64
        $region63: #{tpu_custom_call.1} parent=47 // pred_region
          %415 = dma.done [#allocation9], 512
        $region64: #{tpu_custom_call.1} parent=47 // pred_fallthru
          _
        // Predicated region
        $region65: #{tpu_custom_call.1} parent=47 // pred_check
          %p416 = pneg %p152
        $region66: #{tpu_custom_call.1} parent=47 // pred_check_branch
          %418 = sbr.rel (%p416) target = $region68
        $region67: #{tpu_custom_call.1} parent=47 // pred_region
          %419 = dma.done [#allocation9], 16
        $region68: #{tpu_custom_call.1} parent=47 // pred_fallthru
          _
        // Predicated region
        $region69: #{tpu_custom_call.1} parent=47 // pred_check
          %p420 = pneg %p173
        $region70: #{tpu_custom_call.1} parent=47 // pred_check_branch
          %422 = sbr.rel (%p420) target = $region72
        $region71: #{tpu_custom_call.1} parent=47 // pred_region
          %423 = dma.done [#allocation12], 16
        $region72: #{tpu_custom_call.1} parent=47 // pred_fallthru
          _
        // Predicated region
        $region73: #{tpu_custom_call.1} parent=47 // pred_check
          %p424 = pneg %p194
        $region74: #{tpu_custom_call.1} parent=47 // pred_check_branch
          %426 = sbr.rel (%p424) target = $region76
        $region75: #{tpu_custom_call.1} parent=47 // pred_region
          %427 = dma.done [#allocation12], 16
        $region76: #{tpu_custom_call.1} parent=47 // pred_fallthru
          _
        %s428 = sand.u32 %s55, 1
        %s429 = scalar_lea.sflag [#allocation3], %s428
        %s430 = sand.u32 %s55, 1
        %s431 = smul.addr %s430, 8
        %s432 = scalar_lea.vmem [#allocation2], %s431
        %p433 = pneg %p68
        %p434 = pneg %p65
        %p435 = pneg %p89
        %p436 = pneg %p86
        %p437 = pneg %p110
        %p438 = pneg %p107
        %p439 = pneg %p131
        %p440 = pneg %p128
        %p441 = pneg %p152
        %p442 = pneg %p149
        %p443 = pneg %p173
        %p444 = pneg %p170
        %p445 = pneg %p194
        %p446 = pneg %p191
        %p447 = pneg %p222
        %p448 = pneg %p219
        %s449 = sand.u32 %s209, 1
        %s450 = scalar_lea.sflag [#allocation4], %s449
        %s451 = sand.u32 %s209, 1
        %s452 = smul.addr %s451, 16
        %s453 = scalar_lea.vmem [#allocation14], %s452
        %p454 = pneg %p250
        %p455 = pneg %p247
        %s456 = sand.u32 %s33, 1
        %s457 = scalar_lea.sflag [#allocation16], %s456
        %s458 = sand.u32 %s237, 1
        %s459 = smul.addr %s458, 16
        %s460 = scalar_lea.vmem [#allocation15], %s459
        %p461 = pneg %p278
        %p462 = pneg %p275
        %s463 = sand.u32 %s33, 1
        %s464 = scalar_lea.sflag [#allocation16], %s463
        %s465 = sand.u32 %s265, 1
        %s466 = smul.addr %s465, 16
        %s467 = scalar_lea.vmem [#allocation17], %s466
        %v468 = vld [vmem:[%s399] sm:$0xff]
        %v469 = vld [vmem:[#allocation5] sm:$0xff]
        %v470 = vld [vmem:[#allocation5 + $0x8] sm:$0xff]
        %v471 = vld [vmem:[#allocation5 + $0x10] sm:$0xff]
        %v472 = vld [vmem:[#allocation5 + $0x18] sm:$0xff]
        %v473 = vld [vmem:[#allocation10] sm:$0x1]
        %v475 = vlaneseq
        %v476 = vshrl.u32 %v475, 7
        %v477 = vsub.s32 0, %v476
        %v478 = vrot.slane %v473, %v477
        %vm480 = vcmask 261120
        %v482 = vsel %vm480, %v468, 0
        %484 = vmatprep.subr.mxu0 0.0
        %485 = vmatpush1.msra.mxu0 %v469
        %486 = vmatprep.subr.mxu0 0.0
        %487 = vmatpush1.msra.mxu0 %v470
        %488 = vmatprep.subr.mxu0 0.0
        %489 = vmatpush1.msra.mxu0 %v471
        %490 = vmatprep.subr.mxu0 0.0
        %491 = vmatpush1.msra.mxu0 %v472
        %492 = vmatprep.subr.mxu0 0.0
        %493 = vmatpush1.msra.mxu0 0.0
        %494 = vmatprep.subr.mxu0 0.0
        %495 = vmatpush1.msra.mxu0 0.0
        %496 = vmatprep.subr.mxu0 0.0
        %497 = vmatpush1.msra.mxu0 0.0
        %498 = vmatprep.subr.mxu0 0.0
        %499 = vmatpush1.msra.mxu0 0.0
        %500 = vmatprep.subr.mxu0 0.0
        %501 = vmatpush1.msra.mxu0 0.0
        %502 = vmatprep.subr.mxu0 0.0
        %503 = vmatpush1.msra.mxu0 0.0
        %504 = vmatprep.subr.mxu0 0.0
        %505 = vmatpush1.msra.mxu0 0.0
        %506 = vmatprep.subr.mxu0 0.0
        %507 = vmatpush1.msra.mxu0 0.0
        %508 = vmatprep.subr.mxu0 0.0
        %509 = vmatpush1.msra.mxu0 0.0
        %510 = vmatprep.subr.mxu0 0.0
        %511 = vmatpush1.msra.mxu0 0.0
        %512 = vmatprep.subr.mxu0 0.0
        %513 = vmatpush1.msra.mxu0 0.0
        %514 = vmatprep.subr.mxu0 0.0
        %515 = vmatpush1.msra.mxu0 0.0
        %516 = vmatprep.subr.mxu0 0.0
        %517 = vmatpush1.msra.mxu0 0.0
        %518 = vmatprep.subr.mxu0 0.0
        %519 = vmatpush1.msra.mxu0 0.0
        %520 = vmatprep.subr.mxu0 0.0
        %521 = vmatpush1.msra.mxu0 0.0
        %522 = vmatprep.subr.mxu0 0.0
        %523 = vmatpush1.msra.mxu0 0.0
        %524 = vmatprep.subr.mxu0 0.0
        %525 = vmatpush1.msra.mxu0 0.0
        %526 = vmatprep.subr.mxu0 0.0
        %527 = vmatpush1.msra.mxu0 0.0
        %528 = vmatprep.subr.mxu0 0.0
        %529 = vmatpush1.msra.mxu0 0.0
        %530 = vmatprep.subr.mxu0 0.0
        %531 = vmatpush1.msra.mxu0 0.0
        %532 = vmatprep.subr.mxu0 0.0
        %533 = vmatpush1.msra.mxu0 0.0
        %534 = vmatprep.subr.mxu0 0.0
        %535 = vmatpush1.msra.mxu0 0.0
        %536 = vmatprep.subr.mxu0 0.0
        %537 = vmatpush1.msra.mxu0 0.0
        %538 = vmatprep.subr.mxu0 0.0
        %539 = vmatpush1.msra.mxu0 0.0
        %540 = vmatprep.subr.mxu0 0.0
        %541 = vmatpush1.msra.mxu0 0.0
        %542 = vmatprep.subr.mxu0 0.0
        %543 = vmatpush1.msra.mxu0 0.0
        %544 = vmatprep.subr.mxu0 0.0
        %545 = vmatpush1.msra.mxu0 0.0
        %546 = vmatprep.subr.mxu0 0.0
        %547 = vmatpush1.msra.mxu0 0.0
        %548 = vmatprep.mubr.f32.mxu0 0.0
        %549 = vmatmul.mubr.f32.gmra.mrb[0].mxu0 %v482
        %v550 = vpop.f32.mrb[0].mxu0
        %v551 = vadd.f32 %v478, %v550
        %v552 = vpop.f32.mrb[0].mxu0
        %553 = vdwg.mxu0
        %v554 = vld [vmem:[#allocation7] sm:$0xff]
        %v555 = vld [vmem:[#allocation7 + $0x8] sm:$0xff]
        %v556 = vld [vmem:[#allocation7 + $0x10] sm:$0xff]
        %v557 = vld [vmem:[#allocation7 + $0x18] sm:$0xff]
        %v558 = vld [vmem:[#allocation11] sm:$0x1]
        %v560 = vlaneseq
        %v561 = vshrl.u32 %v560, 7
        %v562 = vsub.s32 0, %v561
        %v563 = vrot.slane %v558, %v562
        %565 = vmatprep.subr.mxu0 0.0
        %566 = vmatpush1.msra.mxu0 %v554
        %567 = vmatprep.subr.mxu0 0.0
        %568 = vmatpush1.msra.mxu0 %v555
        %569 = vmatprep.subr.mxu0 0.0
        %570 = vmatpush1.msra.mxu0 %v556
        %571 = vmatprep.subr.mxu0 0.0
        %572 = vmatpush1.msra.mxu0 %v557
        %573 = vmatprep.subr.mxu0 0.0
        %574 = vmatpush1.msra.mxu0 0.0
        %575 = vmatprep.subr.mxu0 0.0
        %576 = vmatpush1.msra.mxu0 0.0
        %577 = vmatprep.subr.mxu0 0.0
        %578 = vmatpush1.msra.mxu0 0.0
        %579 = vmatprep.subr.mxu0 0.0
        %580 = vmatpush1.msra.mxu0 0.0
        %581 = vmatprep.subr.mxu0 0.0
        %582 = vmatpush1.msra.mxu0 0.0
        %583 = vmatprep.subr.mxu0 0.0
        %584 = vmatpush1.msra.mxu0 0.0
        %585 = vmatprep.subr.mxu0 0.0
        %586 = vmatpush1.msra.mxu0 0.0
        %587 = vmatprep.subr.mxu0 0.0
        %588 = vmatpush1.msra.mxu0 0.0
        %589 = vmatprep.subr.mxu0 0.0
        %590 = vmatpush1.msra.mxu0 0.0
        %591 = vmatprep.subr.mxu0 0.0
        %592 = vmatpush1.msra.mxu0 0.0
        %593 = vmatprep.subr.mxu0 0.0
        %594 = vmatpush1.msra.mxu0 0.0
        %595 = vmatprep.subr.mxu0 0.0
        %596 = vmatpush1.msra.mxu0 0.0
        %597 = vmatprep.subr.mxu0 0.0
        %598 = vmatpush1.msra.mxu0 0.0
        %599 = vmatprep.subr.mxu0 0.0
        %600 = vmatpush1.msra.mxu0 0.0
        %601 = vmatprep.subr.mxu0 0.0
        %602 = vmatpush1.msra.mxu0 0.0
        %603 = vmatprep.subr.mxu0 0.0
        %604 = vmatpush1.msra.mxu0 0.0
        %605 = vmatprep.subr.mxu0 0.0
        %606 = vmatpush1.msra.mxu0 0.0
        %607 = vmatprep.subr.mxu0 0.0
        %608 = vmatpush1.msra.mxu0 0.0
        %609 = vmatprep.subr.mxu0 0.0
        %610 = vmatpush1.msra.mxu0 0.0
        %611 = vmatprep.subr.mxu0 0.0
        %612 = vmatpush1.msra.mxu0 0.0
        %613 = vmatprep.subr.mxu0 0.0
        %614 = vmatpush1.msra.mxu0 0.0
        %615 = vmatprep.subr.mxu0 0.0
        %616 = vmatpush1.msra.mxu0 0.0
        %617 = vmatprep.subr.mxu0 0.0
        %618 = vmatpush1.msra.mxu0 0.0
        %619 = vmatprep.subr.mxu0 0.0
        %620 = vmatpush1.msra.mxu0 0.0
        %621 = vmatprep.subr.mxu0 0.0
        %622 = vmatpush1.msra.mxu0 0.0
        %623 = vmatprep.subr.mxu0 0.0
        %624 = vmatpush1.msra.mxu0 0.0
        %625 = vmatprep.subr.mxu0 0.0
        %626 = vmatpush1.msra.mxu0 0.0
        %627 = vmatprep.subr.mxu0 0.0
        %628 = vmatpush1.msra.mxu0 0.0
        %629 = vmatprep.mubr.f32.mxu0 0.0
        %630 = vmatmul.mubr.f32.gmra.mrb[0].mxu0 %v482
        %v631 = vpop.f32.mrb[0].mxu0
        %v632 = vadd.f32 %v563, %v631
        %v633 = vpop.f32.mrb[0].mxu0
        %634 = vdwg.mxu0
        %v635 = vld [vmem:[#allocation8] sm:$0xff]
        %v636 = vld [vmem:[#allocation8 + $0x8] sm:$0xff]
        %v637 = vld [vmem:[#allocation8 + $0x10] sm:$0xff]
        %v638 = vld [vmem:[#allocation8 + $0x18] sm:$0xff]
        %v639 = vld [vmem:[#allocation13] sm:$0x1]
        %v641 = vlaneseq
        %v642 = vshrl.u32 %v641, 7
        %v643 = vsub.s32 0, %v642
        %v644 = vrot.slane %v639, %v643
        %646 = vmatprep.subr.mxu0 0.0
        %647 = vmatpush1.msra.mxu0 %v635
        %648 = vmatprep.subr.mxu0 0.0
        %649 = vmatpush1.msra.mxu0 %v636
        %650 = vmatprep.subr.mxu0 0.0
        %651 = vmatpush1.msra.mxu0 %v637
        %652 = vmatprep.subr.mxu0 0.0
        %653 = vmatpush1.msra.mxu0 %v638
        %654 = vmatprep.subr.mxu0 0.0
        %655 = vmatpush1.msra.mxu0 0.0
        %656 = vmatprep.subr.mxu0 0.0
        %657 = vmatpush1.msra.mxu0 0.0
        %658 = vmatprep.subr.mxu0 0.0
        %659 = vmatpush1.msra.mxu0 0.0
        %660 = vmatprep.subr.mxu0 0.0
        %661 = vmatpush1.msra.mxu0 0.0
        %662 = vmatprep.subr.mxu0 0.0
        %663 = vmatpush1.msra.mxu0 0.0
        %664 = vmatprep.subr.mxu0 0.0
        %665 = vmatpush1.msra.mxu0 0.0
        %666 = vmatprep.subr.mxu0 0.0
        %667 = vmatpush1.msra.mxu0 0.0
        %668 = vmatprep.subr.mxu0 0.0
        %669 = vmatpush1.msra.mxu0 0.0
        %670 = vmatprep.subr.mxu0 0.0
        %671 = vmatpush1.msra.mxu0 0.0
        %672 = vmatprep.subr.mxu0 0.0
        %673 = vmatpush1.msra.mxu0 0.0
        %674 = vmatprep.subr.mxu0 0.0
        %675 = vmatpush1.msra.mxu0 0.0
        %676 = vmatprep.subr.mxu0 0.0
        %677 = vmatpush1.msra.mxu0 0.0
        %678 = vmatprep.subr.mxu0 0.0
        %679 = vmatpush1.msra.mxu0 0.0
        %680 = vmatprep.subr.mxu0 0.0
        %681 = vmatpush1.msra.mxu0 0.0
        %682 = vmatprep.subr.mxu0 0.0
        %683 = vmatpush1.msra.mxu0 0.0
        %684 = vmatprep.subr.mxu0 0.0
        %685 = vmatpush1.msra.mxu0 0.0
        %686 = vmatprep.subr.mxu0 0.0
        %687 = vmatpush1.msra.mxu0 0.0
        %688 = vmatprep.subr.mxu0 0.0
        %689 = vmatpush1.msra.mxu0 0.0
        %690 = vmatprep.subr.mxu0 0.0
        %691 = vmatpush1.msra.mxu0 0.0
        %692 = vmatprep.subr.mxu0 0.0
        %693 = vmatpush1.msra.mxu0 0.0
        %694 = vmatprep.subr.mxu0 0.0
        %695 = vmatpush1.msra.mxu0 0.0
        %696 = vmatprep.subr.mxu0 0.0
        %697 = vmatpush1.msra.mxu0 0.0
        %698 = vmatprep.subr.mxu0 0.0
        %699 = vmatpush1.msra.mxu0 0.0
        %700 = vmatprep.subr.mxu0 0.0
        %701 = vmatpush1.msra.mxu0 0.0
        %702 = vmatprep.subr.mxu0 0.0
        %703 = vmatpush1.msra.mxu0 0.0
        %704 = vmatprep.subr.mxu0 0.0
        %705 = vmatpush1.msra.mxu0 0.0
        %706 = vmatprep.subr.mxu0 0.0
        %707 = vmatpush1.msra.mxu0 0.0
        %708 = vmatprep.subr.mxu0 0.0
        %709 = vmatpush1.msra.mxu0 0.0
        %710 = vmatprep.mubr.f32.mxu0 0.0
        %711 = vmatmul.mubr.f32.gmra.mrb[0].mxu0 %v482
        %v712 = vpop.f32.mrb[0].mxu0
        %v713 = vadd.f32 %v644, %v712
        %v714 = vpop.f32.mrb[0].mxu0
        %715 = vdwg.mxu0
        %v716 = vpack.c.bf16 %v551, %v551
        %vm717 = vcmask 60416
        %718 = vst.msk [vmem:[%s453] sm:$0xf] %vm717, %v716
        %v719 = vpack.c.bf16 %v632, %v632
        %720 = vst.msk [vmem:[%s460] sm:$0xf] %vm717, %v719
        %v721 = vpack.c.bf16 %v713, %v713
        %722 = vst.msk [vmem:[%s467] sm:$0xf] %vm717, %v721
        %v724 = vunpack.c.l.b16 %v716
        %v725 = vpack.c.b16 %v724, %v724
        %726 = vrot.lane.b32.xlu0 %v725, 120
        %v727 = vpop.permute.xlu0 %726
        %s729 = scalar_lea.vmem %s453, 4 [#allocation14]
        %730 = vst.msk [vmem:[%s729] sm:$0xf] %vm717, %v727
        %v732 = vunpack.c.l.b16 %v719
        %v733 = vpack.c.b16 %v732, %v732
        %734 = vrot.lane.b32.xlu0 %v733, 120
        %v735 = vpop.permute.xlu0 %734
        %s737 = scalar_lea.vmem %s460, 4 [#allocation15]
        %738 = vst.msk [vmem:[%s737] sm:$0xf] %vm717, %v735
        %v740 = vunpack.c.l.b16 %v721
        %v741 = vpack.c.b16 %v740, %v740
        %742 = vrot.lane.b32.xlu0 %v741, 120
        %v743 = vpop.permute.xlu0 %742
        %s745 = scalar_lea.vmem %s467, 4 [#allocation17]
        %746 = vst.msk [vmem:[%s745] sm:$0xf] %vm717, %v743
        %747 = vrot.lane.b32.xlu0 %v725, 112
        %v748 = vpop.permute.xlu0 %747
        %s750 = scalar_lea.vmem %s453, 8 [#allocation14]
        %751 = vst.msk [vmem:[%s750] sm:$0xf] %vm717, %v748
        %752 = vrot.lane.b32.xlu0 %v733, 112
        %v753 = vpop.permute.xlu0 %752
        %s755 = scalar_lea.vmem %s460, 8 [#allocation15]
        %756 = vst.msk [vmem:[%s755] sm:$0xf] %vm717, %v753
        %757 = vrot.lane.b32.xlu0 %v741, 112
        %v758 = vpop.permute.xlu0 %757
        %s760 = scalar_lea.vmem %s467, 8 [#allocation17]
        %761 = vst.msk [vmem:[%s760] sm:$0xf] %vm717, %v758
        %762 = vrot.lane.b32.xlu0 %v725, 104
        %v763 = vpop.permute.xlu0 %762
        %s765 = scalar_lea.vmem %s453, 12 [#allocation14]
        %766 = vst.msk [vmem:[%s765] sm:$0xf] %vm717, %v763
        %767 = vrot.lane.b32.xlu0 %v733, 104
        %v768 = vpop.permute.xlu0 %767
        %s770 = scalar_lea.vmem %s460, 12 [#allocation15]
        %771 = vst.msk [vmem:[%s770] sm:$0xf] %vm717, %v768
        %772 = vrot.lane.b32.xlu0 %v741, 104
        %v773 = vpop.permute.xlu0 %772
        %s775 = scalar_lea.vmem %s467, 12 [#allocation17]
        %776 = vst.msk [vmem:[%s775] sm:$0xf] %vm717, %v773
        %s777 = sand.u32 %s209, 1
        %s778 = scalar_lea.sflag [#allocation4], %s777
        %s779 = sand.u32 %s209, 1
        %s780 = smul.addr %s779, 16
        %s781 = scalar_lea.vmem [#allocation14], %s780
        %s782 = sand.u32 %s33, 1
        %s783 = scalar_lea.sflag [#allocation16], %s782
        %s784 = sand.u32 %s237, 1
        %s785 = smul.addr %s784, 16
        %s786 = scalar_lea.vmem [#allocation15], %s785
        %s787 = sand.u32 %s33, 1
        %s788 = scalar_lea.sflag [#allocation16], %s787
        %s789 = sand.u32 %s265, 1
        %s790 = smul.addr %s789, 16
        %s791 = scalar_lea.vmem [#allocation17], %s790
        // Predicated region
        $region77: #{tpu_custom_call.1} parent=47 // pred_check
          %p792 = pneg %p219
        $region78: #{tpu_custom_call.1} parent=47 // pred_check_branch
          %794 = sbr.rel (%p792) target = $region80
        $region79: #{tpu_custom_call.1} parent=47 // pred_region
          %s796 = ssub.s32 256, 256
          %797 = vsyncadd %s778, %s796
          %s798 = smul.addr %s37, 4
          %s799 = sadd.s32 %s38, %s798
          %s800 = smul.addr %s799, 64
          %s801 = scalar_lea.hbm %s7, %s800
          %s802 = sshll.u32 %s781, 4
          %s803 = int_to_ptr.vmem [resolvable:$true] %s802
          %808 = dma.vmem_to_hbm [thread:$0]  %s803, 256, %s801, %s778, 64, 64, 4
        $region80: #{tpu_custom_call.1} parent=47 // pred_fallthru
          _
        // Predicated region
        $region81: #{tpu_custom_call.1} parent=47 // pred_check
          %p809 = pneg %p247
        $region82: #{tpu_custom_call.1} parent=47 // pred_check_branch
          %811 = sbr.rel (%p809) target = $region84
        $region83: #{tpu_custom_call.1} parent=47 // pred_region
          %s813 = ssub.s32 256, 256
          %814 = vsyncadd %s783, %s813
          %s815 = smul.addr %s37, 4
          %s816 = sadd.s32 %s38, %s815
          %s817 = smul.addr %s816, 64
          %s818 = scalar_lea.hbm %s8, %s817
          %s819 = sshll.u32 %s786, 4
          %s820 = int_to_ptr.vmem [resolvable:$true] %s819
          %825 = dma.vmem_to_hbm [thread:$0]  %s820, 256, %s818, %s783, 64, 64, 4
        $region84: #{tpu_custom_call.1} parent=47 // pred_fallthru
          _
        // Predicated region
        $region85: #{tpu_custom_call.1} parent=47 // pred_check
          %p826 = pneg %p275
        $region86: #{tpu_custom_call.1} parent=47 // pred_check_branch
          %828 = sbr.rel (%p826) target = $region88
        $region87: #{tpu_custom_call.1} parent=47 // pred_region
          %s830 = ssub.s32 256, 256
          %831 = vsyncadd %s788, %s830
          %s832 = smul.addr %s37, 4
          %s833 = sadd.s32 %s38, %s832
          %s834 = smul.addr %s833, 64
          %s835 = scalar_lea.hbm %s9, %s834
          %s836 = sshll.u32 %s791, 4
          %s837 = int_to_ptr.vmem [resolvable:$true] %s836
          %842 = dma.vmem_to_hbm [thread:$0]  %s837, 256, %s835, %s788, 64, 64, 4
        $region88: #{tpu_custom_call.1} parent=47 // pred_fallthru
          _
      $region48: #{tpu_custom_call.1} parent=5 // pred_fallthru
        _
      %p843 = scmp.le.s32.totalorder 2, %s28
      // Predicated region
      $region89: #{tpu_custom_call.1} parent=5 // pred_check
        %p844 = pneg %p843
      $region90: #{tpu_custom_call.1} parent=5 // pred_check_branch
        %846 = sbr.rel (%p844) target = $region92
      $region91: #{tpu_custom_call.1} parent=5 // pred_region
        %s847 = ssub.s32 %s28, 2
        // Predicated region
        $region93: #{tpu_custom_call.1} parent=91 // pred_check
          %p848 = pneg %p225
        $region94: #{tpu_custom_call.1} parent=91 // pred_check_branch
          %850 = sbr.rel (%p848) target = $region96
        $region95: #{tpu_custom_call.1} parent=91 // pred_region
          %s851 = sand.u32 %s210, 1
          %s852 = scalar_lea.sflag [#allocation4], %s851
          %s853 = sand.u32 %s210, 1
          %s854 = smul.addr %s853, 16
          %s855 = scalar_lea.vmem [#allocation14], %s854
          %856 = dma.done %s852, 256
        $region96: #{tpu_custom_call.1} parent=91 // pred_fallthru
          _
        // Predicated region
        $region97: #{tpu_custom_call.1} parent=91 // pred_check
          %p857 = pneg %p253
        $region98: #{tpu_custom_call.1} parent=91 // pred_check_branch
          %859 = sbr.rel (%p857) target = $region100
        $region99: #{tpu_custom_call.1} parent=91 // pred_region
          %s860 = sand.u32 %s34, 1
          %s861 = scalar_lea.sflag [#allocation16], %s860
          %s862 = sand.u32 %s238, 1
          %s863 = smul.addr %s862, 16
          %s864 = scalar_lea.vmem [#allocation15], %s863
          %865 = dma.done %s861, 256
        $region100: #{tpu_custom_call.1} parent=91 // pred_fallthru
          _
        // Predicated region
        $region101: #{tpu_custom_call.1} parent=91 // pred_check
          %p866 = pneg %p281
        $region102: #{tpu_custom_call.1} parent=91 // pred_check_branch
          %868 = sbr.rel (%p866) target = $region104
        $region103: #{tpu_custom_call.1} parent=91 // pred_region
          %s869 = sand.u32 %s34, 1
          %s870 = scalar_lea.sflag [#allocation16], %s869
          %s871 = sand.u32 %s266, 1
          %s872 = smul.addr %s871, 16
          %s873 = scalar_lea.vmem [#allocation17], %s872
          %874 = dma.done %s870, 256
        $region104: #{tpu_custom_call.1} parent=91 // pred_fallthru
          _
      $region92: #{tpu_custom_call.1} parent=5 // pred_fallthru
        _
    $region6: #{tpu_custom_call.1} parent=1 // loop_footer
      %s32 = sadd.s32 1, %s28
    $region7: #{tpu_custom_call.1} parent=1 // loop_footer_branch
      %27 = sbr.rel target = $region3
    $region8: #{tpu_custom_call.1} parent=1 // loop_exit
      _
    %875 = vsyncpa [#allocation3], 1
    %s876 = scalar_lea.sflag [#allocation3], 1
    %877 = vsyncpa %s876, 1
    %878 = vsyncpa [#allocation6], 1
    %879 = vsyncpa [#allocation9], 1
    %880 = vsyncpa [#allocation12], 1
    %881 = vsyncpa [#allocation4], 1
    %s882 = scalar_lea.sflag [#allocation4], 1
    %883 = vsyncpa %s882, 1
    %884 = vsyncpa [#allocation16], 1
    %s885 = scalar_lea.sflag [#allocation16], 1
    %886 = vsyncpa %s885, 1

</llo_original>
